<compile_context>
chip_gen: v5e
topology: v5e:2x2
jax: 0.10.0
libtpu: 0.0.40
codegen_flags: <defaults>
</compile_context>

<pallas_src>
import jax
import jax.numpy as jnp
from jax.experimental import pallas as pl
from jax.experimental.pallas import tpu as pltpu


def attention_kernel(x_ref, h_ref, w1_ref, w2_ref, b_ref, v_ref, out_ref):
    bt, S, D_in = x_ref.shape
    H = w1_ref.shape[1]

    x = x_ref[...]                                          # (bt, S, D_in) f32
    x_bf = x.reshape(bt * S, D_in).astype(jnp.bfloat16)     # MXU operand only

    # Input projection: one MXU matmul over the whole block (bf16 in, f32 acc).
    s1 = jnp.dot(x_bf, w1_ref[...],
                 preferred_element_type=jnp.float32)        # (bt*S, H)

    # Hidden projection + merged bias (b1 + b2), broadcast over S below.
    s2 = jnp.dot(h_ref[...], w2_ref[...],
                 preferred_element_type=jnp.float32) + b_ref[...]   # (bt, H)

    # score = tanh(w1(x) + w2(hidden) + b)   (f32 elementwise)
    score = jnp.tanh(s1.reshape(bt, S, H) + s2[:, None, :])          # (bt, S, H)

    # Attention logits: VPU multiply + lane reduce (avoids an N=1 MXU matmul).
    # bv is omitted: softmax over S is invariant to a per-item constant shift.
    logits = jnp.sum(score * v_ref[...], axis=-1)                    # (bt, S)

    # Numerically-stable, lane-dense softmax over the sequence axis.
    m = jnp.max(logits, axis=-1, keepdims=True)                      # (bt, 1)
    e = jnp.exp(logits - m)                                          # (bt, S)
    denom = jnp.sum(e, axis=-1, keepdims=True)                       # (bt, 1)
    attn = e * pl.reciprocal(denom, approx=True)                     # (bt, S)

    # context_vector = (attention_weights * x).sum(axis=1), in f32.
    # TODO(synk): at larger S switch to an MXU contraction
    # (jnp.einsum('bs,bsd->bd', attn, x)); at S=8 the VPU+XLU path is fine.
    ctx = jnp.sum(attn[:, :, None] * x, axis=1)                      # (bt, D_in)
    out_ref[...] = ctx.astype(out_ref.dtype)


def _pick_batch_tile(B):
    # One grid step for tiny B (per-step overhead ~0.35us dominates); once B is
    # large, tile in sublane-aligned chunks so x double-buffers and the batch
    # axis can shard across v7x's two TensorCores.
    if B >= 16 and B % 8 == 0:
        return 8
    return B


def attention_forward(x, hidden, params):
    """x: (B, S, D_in) f32; hidden: (1, B, H) f32. Returns (B, D_in) f32."""
    B, S, D_in = x.shape
    H = params["w1"].shape[1]

    # hidden.transpose(0, 1): (1, B, H) -> (B, 1, H); squeeze to (B, H).
    h = jnp.transpose(hidden, (1, 0, 2)).reshape(B, H)

    # MXU operands in bf16 (f32 accumulation inside the kernel).
    w1 = params["w1"].astype(jnp.bfloat16)             # (D_in, H)
    w2 = params["w2"].astype(jnp.bfloat16)             # (H, H)
    h = h.astype(jnp.bfloat16)                         # (B, H)
    # Merged bias: b1 and b2 both broadcast onto every (b, s, :) element.
    b = (params["b1"] + params["b2"]).reshape(1, H).astype(jnp.float32)
    # v as a (1, H) row for the in-kernel VPU lane reduce; bv dropped entirely.
    v = params["v"].reshape(1, H).astype(jnp.float32)

    bt = _pick_batch_tile(B)
    grid = (B // bt,)

    grid_spec = pltpu.PrefetchScalarGridSpec(
        num_scalar_prefetch=0,
        grid=grid,
        in_specs=[
            pl.BlockSpec((bt, S, D_in), lambda i: (i, 0, 0)),   # x
            pl.BlockSpec((bt, H), lambda i: (i, 0)),            # hidden
            pl.BlockSpec((D_in, H), lambda i: (0, 0)),          # w1 (resident)
            pl.BlockSpec((H, H), lambda i: (0, 0)),             # w2 (resident)
            pl.BlockSpec((1, H), lambda i: (0, 0)),             # merged bias
            pl.BlockSpec((1, H), lambda i: (0, 0)),             # v row
        ],
        out_specs=pl.BlockSpec((bt, D_in), lambda i: (i, 0)),   # lane-dense out
    )

    return pl.pallas_call(
        attention_kernel,
        out_shape=jax.ShapeDtypeStruct((B, D_in), jnp.float32),
        grid_spec=grid_spec,
        compiler_params=pltpu.CompilerParams(
            dimension_semantics=("parallel",)),
    )(x, h, w1, w2, b, v)


def attention_reference(x, hidden, params):
    """Pure-JAX f32 reference mirroring the PyTorch forward (incl. bv)."""
    h_t = jnp.transpose(hidden, (1, 0, 2))                      # (B, 1, H)
    s1 = x @ params["w1"] + params["b1"]                        # (B, S, H)
    s2 = h_t @ params["w2"] + params["b2"]                      # (B, 1, H)
    score = jnp.tanh(s1 + s2)
    logits = score @ params["v"] + params["bv"]                 # (B, S, 1)
    attn = jax.nn.softmax(logits, axis=1)
    return jnp.sum(attn * x, axis=1)                            # (B, D_in)


def init_params(key, input_size, hidden_size):
    k1, k2, k3, k4, k5, k6 = jax.random.split(key, 6)
    # Weights stored as (in, out) so the kernel does x @ W (equivalent to
    # PyTorch's x @ W.T with its (out, in) storage).
    return {
        "w1": jax.random.normal(k1, (input_size, hidden_size), jnp.float32) * 0.05,
        "b1": jax.random.normal(k2, (hidden_size,), jnp.float32) * 0.05,
        "w2": jax.random.normal(k3, (hidden_size, hidden_size), jnp.float32) * 0.05,
        "b2": jax.random.normal(k4, (hidden_size,), jnp.float32) * 0.05,
        "v": jax.random.normal(k5, (hidden_size, 1), jnp.float32) * 0.05,
        "bv": jax.random.normal(k6, (1,), jnp.float32) * 0.05,
    }


if __name__ == "__main__":
    # Small shapes; D_in/H chosen as 128 so feature dims fill the 128-lane vreg.
    B, S, D_IN, H = 4, 8, 128, 128

    key = jax.random.PRNGKey(0)
    kx, kh, kp = jax.random.split(key, 3)

    x = jax.random.normal(kx, (B, S, D_IN), jnp.float32)
    hidden = jax.random.normal(kh, (1, B, H), jnp.float32)   # RNN-style (1, B, H)
    params = init_params(kp, D_IN, H)

    out = attention_forward(x, hidden, params)
    out = jax.block_until_ready(out)

    ref = attention_reference(x, hidden, params)
    assert out.shape == (B, D_IN)
    # Tolerance covers bf16 MXU operands and the EUP approximate reciprocal.
    assert jnp.allclose(out, ref, atol=2e-2, rtol=2e-2), "mismatch vs reference"

    print("KERNEL_OK")
</pallas_src>

<mosaic_0001>
module attributes {stable_mosaic.version = 11 : i64} {
  func.func @attention_kernel(%arg0: i32, %arg1: memref<4x8x128xf32, #tpu.memory_space<vmem>>, %arg2: memref<4x128xbf16, #tpu.memory_space<vmem>>, %arg3: memref<128x128xbf16, #tpu.memory_space<vmem>>, %arg4: memref<128x128xbf16, #tpu.memory_space<vmem>>, %arg5: memref<1x128xf32, #tpu.memory_space<vmem>>, %arg6: memref<1x128xf32, #tpu.memory_space<vmem>>, %arg7: memref<4x128xf32, #tpu.memory_space<vmem>>) attributes {dimension_semantics = [#tpu.dimension_semantics<parallel>], iteration_bounds = array<i64: 1>, scalar_prefetch = 0 : i64, scratch_operands = 0 : i64, tpu.core_type = #tpu.core_type<tc>, window_params = [{transform_indices = @transform_0, window_bounds = array<i64: 4, 8, 128>}, {transform_indices = @transform_1, window_bounds = array<i64: 4, 128>}, {pipeline_mode = #tpu.pipeline_mode<synchronous>, transform_indices = @transform_2, window_bounds = array<i64: 128, 128>}, {pipeline_mode = #tpu.pipeline_mode<synchronous>, transform_indices = @transform_3, window_bounds = array<i64: 128, 128>}, {pipeline_mode = #tpu.pipeline_mode<synchronous>, transform_indices = @transform_4, window_bounds = array<i64: 1, 128>}, {pipeline_mode = #tpu.pipeline_mode<synchronous>, transform_indices = @transform_5, window_bounds = array<i64: 1, 128>}, {transform_indices = @transform_6, window_bounds = array<i64: 4, 128>}]} {
    %c0 = arith.constant 0 : index
    %c0_0 = arith.constant 0 : index
    %c0_1 = arith.constant 0 : index
    %0 = vector.load %arg1[%c0, %c0_0, %c0_1] : memref<4x8x128xf32, #tpu.memory_space<vmem>>, vector<4x8x128xf32>
    %1 = vector.shape_cast %0 : vector<4x8x128xf32> to vector<32x128xf32>
    %2 = arith.truncf %1 : vector<32x128xf32> to vector<32x128xbf16>
    %c0_2 = arith.constant 0 : index
    %c0_3 = arith.constant 0 : index
    %3 = vector.load %arg3[%c0_2, %c0_3] : memref<128x128xbf16, #tpu.memory_space<vmem>>, vector<128x128xbf16>
    %cst = arith.constant dense<0.000000e+00> : vector<32x128xf32>
    %4 = tpu.matmul %2, %3, %cst {dimension_numbers = #tpu.dot_dimension_numbers<[1], [0], [0], [1], [0, 0, 1, 1], [], []>} : vector<32x128xbf16>, vector<128x128xbf16>, vector<32x128xf32> -> vector<32x128xf32>
    %c0_4 = arith.constant 0 : index
    %c0_5 = arith.constant 0 : index
    %5 = vector.load %arg2[%c0_4, %c0_5] : memref<4x128xbf16, #tpu.memory_space<vmem>>, vector<4x128xbf16>
    %c0_6 = arith.constant 0 : index
    %c0_7 = arith.constant 0 : index
    %6 = vector.load %arg4[%c0_6, %c0_7] : memref<128x128xbf16, #tpu.memory_space<vmem>>, vector<128x128xbf16>
    %cst_8 = arith.constant dense<0.000000e+00> : vector<4x128xf32>
    %7 = tpu.matmul %5, %6, %cst_8 {dimension_numbers = #tpu.dot_dimension_numbers<[1], [0], [0], [1], [0, 0, 1, 1], [], []>} : vector<4x128xbf16>, vector<128x128xbf16>, vector<4x128xf32> -> vector<4x128xf32>
    %c0_9 = arith.constant 0 : index
    %c0_10 = arith.constant 0 : index
    %8 = vector.load %arg5[%c0_9, %c0_10] : memref<1x128xf32, #tpu.memory_space<vmem>>, vector<1x128xf32>
    %9 = vector.broadcast %8 : vector<1x128xf32> to vector<4x128xf32>
    %10 = arith.addf %7, %9 : vector<4x128xf32>
    %11 = vector.shape_cast %4 : vector<32x128xf32> to vector<4x8x128xf32>
    %12 = vector.shape_cast %10 : vector<4x128xf32> to vector<4x1x128xf32>
    %13 = vector.broadcast %12 : vector<4x1x128xf32> to vector<4x8x128xf32>
    %14 = arith.addf %11, %13 : vector<4x8x128xf32>
    %15 = math.tanh %14 : vector<4x8x128xf32>
    %c0_11 = arith.constant 0 : index
    %c0_12 = arith.constant 0 : index
    %16 = vector.load %arg6[%c0_11, %c0_12] : memref<1x128xf32, #tpu.memory_space<vmem>>, vector<1x128xf32>
    %17 = vector.shape_cast %16 : vector<1x128xf32> to vector<1x1x128xf32>
    %18 = vector.broadcast %17 : vector<1x1x128xf32> to vector<4x8x128xf32>
    %19 = arith.mulf %15, %18 : vector<4x8x128xf32>
    %cst_13 = arith.constant dense<0.000000e+00> : vector<4x8xf32>
    %20 = vector.multi_reduction <add>, %19, %cst_13 [2] : vector<4x8x128xf32> to vector<4x8xf32>
    %cst_14 = arith.constant dense<0xFF800000> : vector<4xf32>
    %21 = vector.multi_reduction <maximumf>, %20, %cst_14 [1] : vector<4x8xf32> to vector<4xf32>
    %22 = vector.shape_cast %21 : vector<4xf32> to vector<4x1xf32>
    %23 = vector.broadcast %22 : vector<4x1xf32> to vector<4x8xf32>
    %24 = arith.subf %20, %23 : vector<4x8xf32>
    %25 = math.exp %24 : vector<4x8xf32>
    %cst_15 = arith.constant dense<0.000000e+00> : vector<4xf32>
    %26 = vector.multi_reduction <add>, %25, %cst_15 [1] : vector<4x8xf32> to vector<4xf32>
    %27 = vector.shape_cast %26 : vector<4xf32> to vector<4x1xf32>
    %28 = tpu.reciprocal %27 {approx = true} : vector<4x1xf32> -> vector<4x1xf32>
    %29 = vector.broadcast %28 : vector<4x1xf32> to vector<4x8xf32>
    %30 = arith.mulf %25, %29 : vector<4x8xf32>
    %31 = vector.shape_cast %30 : vector<4x8xf32> to vector<4x8x1xf32>
    %32 = vector.broadcast %31 : vector<4x8x1xf32> to vector<4x8x128xf32>
    %33 = arith.mulf %32, %0 : vector<4x8x128xf32>
    %cst_16 = arith.constant dense<0.000000e+00> : vector<4x128xf32>
    %34 = vector.multi_reduction <add>, %33, %cst_16 [1] : vector<4x8x128xf32> to vector<4x128xf32>
    %c0_17 = arith.constant 0 : index
    %c0_18 = arith.constant 0 : index
    %35 = vector.load %arg7[%c0_17, %c0_18] : memref<4x128xf32, #tpu.memory_space<vmem>>, vector<4x128xf32>
    tpu.vector_store %arg7[%c0_17, %c0_18], %34 {strides = array<i32>} : memref<4x128xf32, #tpu.memory_space<vmem>>, vector<4x128xf32>,
    return
  }
  func.func @transform_0(%arg0: i32) -> (i32, i32, i32) {
    %c0_i32 = arith.constant 0 : i32
    %c0_i32_0 = arith.constant 0 : i32
    %c0_i32_1 = arith.constant 0 : i32
    return %arg0, %c0_i32, %c0_i32_0 : i32, i32, i32
  }
  func.func @transform_1(%arg0: i32) -> (i32, i32) {
    %c0_i32 = arith.constant 0 : i32
    %c0_i32_0 = arith.constant 0 : i32
    return %arg0, %c0_i32 : i32, i32
  }
  func.func @transform_2(%arg0: i32) -> (i32, i32) {
    %c0_i32 = arith.constant 0 : i32
    %c0_i32_0 = arith.constant 0 : i32
    %c0_i32_1 = arith.constant 0 : i32
    return %c0_i32, %c0_i32_0 : i32, i32
  }
  func.func @transform_3(%arg0: i32) -> (i32, i32) {
    %c0_i32 = arith.constant 0 : i32
    %c0_i32_0 = arith.constant 0 : i32
    %c0_i32_1 = arith.constant 0 : i32
    return %c0_i32, %c0_i32_0 : i32, i32
  }
  func.func @transform_4(%arg0: i32) -> (i32, i32) {
    %c0_i32 = arith.constant 0 : i32
    %c0_i32_0 = arith.constant 0 : i32
    %c0_i32_1 = arith.constant 0 : i32
    return %c0_i32, %c0_i32_0 : i32, i32
  }
  func.func @transform_5(%arg0: i32) -> (i32, i32) {
    %c0_i32 = arith.constant 0 : i32
    %c0_i32_0 = arith.constant 0 : i32
    %c0_i32_1 = arith.constant 0 : i32
    return %c0_i32, %c0_i32_0 : i32, i32
  }
  func.func @transform_6(%arg0: i32) -> (i32, i32) {
    %c0_i32 = arith.constant 0 : i32
    %c0_i32_0 = arith.constant 0 : i32
    return %arg0, %c0_i32 : i32, i32
  }
}

</mosaic_0001>

<llo_original>
// kernel: tpu_custom_call.1
$region0: #{tpu_custom_call.1}
  #allocation0 [shape = 'u32[]', space=smem, size = 0x4, offset = 0x4, fixed_abs, tag = 'smem constant byte address 0x4 - core index']
  #allocation1 [shape = 'u32[72,128]{1,0:T(1,128)}', space=vmem, size = 0x9000, scoped, tag = 'internal scratch']
  %s0 = inlined_call_operand.hbm [shape: f32[4,8,128], index: 0, kind: input, shape index: {}]
  %s1 = inlined_call_operand.hbm [shape: bf16[4,128], index: 1, kind: input, shape index: {}]
  %s2 = inlined_call_operand.hbm [shape: bf16[128,128], index: 2, kind: input, shape index: {}]
  %s3 = inlined_call_operand.hbm [shape: bf16[128,128], index: 3, kind: input, shape index: {}]
  %s4 = inlined_call_operand.vmem [shape: f32[1,128], index: 4, kind: input, shape index: {}]
  %s5 = inlined_call_operand.vmem [shape: f32[1,128], index: 5, kind: input, shape index: {}]
  %s6 = inlined_call_operand.hbm [shape: f32[4,128], index: 6, kind: output, shape index: {}]
  %s7 = sld [smem:[#allocation0]]
  $region50: #{tpu_custom_call.1} parent=0
    _
  %s9 = ssub.s32 1, %s7
  %s10 = scalar_select 0, %s9, %s7
  $region1: #{tpu_custom_call.1} parent=0
    #allocation2 [shape = 'u8[16384]{0}', space=vmem, size = 0x4000, scoped, tag = 'input window, operand 0, single buffered']
    #allocation3 [shape = 's32[1]{0}', space=sflag, size = 0x4, scoped, tag = 'scoped memory for tpu_custom_call.1']
    #allocation4 [shape = 's32[1]{0}', space=sflag, size = 0x4, scoped, tag = 'scoped memory for tpu_custom_call.1']
    #allocation5 [shape = 'u8[1024]{0}', space=vmem, size = 0x400, scoped, tag = 'input window, operand 1, single buffered']
    #allocation6 [shape = 's32[1]{0}', space=sflag, size = 0x4, scoped, tag = 'scoped memory for tpu_custom_call.1']
    #allocation7 [shape = 'u8[32768]{0}', space=vmem, size = 0x8000, scoped, tag = 'input window, operand 2, single buffered']
    #allocation8 [shape = 'u8[32768]{0}', space=vmem, size = 0x8000, scoped, tag = 'input window, operand 3, single buffered']
    #allocation9 [shape = 's32[1]{0}', space=sflag, size = 0x4, scoped, tag = 'scoped memory for tpu_custom_call.1']
    #allocation10 [shape = 'u8[2048]{0}', space=vmem, size = 0x800, scoped, tag = 'output window, operand 0, single buffered']
    %11 = vsyncpa [#allocation3], 0
    %12 = vsyncpa [#allocation6], 0
    %13 = vsyncpa [#allocation9], 0
    %14 = vsyncpa [#allocation4], 0
    // Predicated region
    $region2: #{tpu_custom_call.1} parent=1 // pred_check
      _
    $region3: #{tpu_custom_call.1} parent=1 // pred_check_branch
      %16 = sbr.rel (0) target = $region5
    $region4: #{tpu_custom_call.1} parent=1 // pred_region
      %18 = vsyncadd [#allocation3], 0
      %s19 = sshll.u32 %s0, 4
      %s20 = int_to_ptr.hbm [resolvable:$true] %s19
      %s21 = sshll.u32 [#allocation2], 4
      %s22 = int_to_ptr.vmem [resolvable:$true] %s21
      %27 = dma.hbm_to_vmem [thread:$0]  %s20, 512, %s22, [#allocation3], 128, 128, 8
    $region5: #{tpu_custom_call.1} parent=1 // pred_fallthru
      _
    // Predicated region
    $region6: #{tpu_custom_call.1} parent=1 // pred_check
      _
    $region7: #{tpu_custom_call.1} parent=1 // pred_check_branch
      %29 = sbr.rel (0) target = $region9
    $region8: #{tpu_custom_call.1} parent=1 // pred_region
      %31 = vsyncadd [#allocation6], 0
      %s33 = sshll.u32 %s1, 4
      %s34 = int_to_ptr.hbm [resolvable:$true] %s33
      %s35 = sshll.u32 [#allocation5], 4
      %s36 = int_to_ptr.vmem [resolvable:$true] %s35
      %38 = dma.hbm_to_vmem [thread:$0]  %s34, 32, %s36, [#allocation6]
    $region9: #{tpu_custom_call.1} parent=1 // pred_fallthru
      _
    // Predicated region
    $region10: #{tpu_custom_call.1} parent=1 // pred_check
      _
    $region11: #{tpu_custom_call.1} parent=1 // pred_check_branch
      %40 = sbr.rel (0) target = $region13
    $region12: #{tpu_custom_call.1} parent=1 // pred_region
      %42 = vsyncadd [#allocation6], 0
      %s43 = sshll.u32 %s2, 4
      %s44 = int_to_ptr.hbm [resolvable:$true] %s43
      %s45 = sshll.u32 [#allocation7], 4
      %s46 = int_to_ptr.vmem [resolvable:$true] %s45
      %51 = dma.hbm_to_vmem [thread:$0]  %s44, 1024, %s46, [#allocation6], 64, 64, 4
    $region13: #{tpu_custom_call.1} parent=1 // pred_fallthru
      _
    // Predicated region
    $region14: #{tpu_custom_call.1} parent=1 // pred_check
      _
    $region15: #{tpu_custom_call.1} parent=1 // pred_check_branch
      %53 = sbr.rel (0) target = $region17
    $region16: #{tpu_custom_call.1} parent=1 // pred_region
      %55 = vsyncadd [#allocation9], 0
      %s56 = sshll.u32 %s3, 4
      %s57 = int_to_ptr.hbm [resolvable:$true] %s56
      %s58 = sshll.u32 [#allocation8], 4
      %s59 = int_to_ptr.vmem [resolvable:$true] %s58
      %64 = dma.hbm_to_vmem [thread:$0]  %s57, 1024, %s59, [#allocation9], 64, 64, 4
    $region17: #{tpu_custom_call.1} parent=1 // pred_fallthru
      _
    // Predicated region
    $region18: #{tpu_custom_call.1} parent=1 // pred_check
      _
    $region19: #{tpu_custom_call.1} parent=1 // pred_check_branch
      %66 = sbr.rel (0) target = $region21
    $region20: #{tpu_custom_call.1} parent=1 // pred_region
      _
    $region21: #{tpu_custom_call.1} parent=1 // pred_fallthru
      _
    // Predicated region
    $region22: #{tpu_custom_call.1} parent=1 // pred_check
      _
    $region23: #{tpu_custom_call.1} parent=1 // pred_check_branch
      %68 = sbr.rel (0) target = $region25
    $region24: #{tpu_custom_call.1} parent=1 // pred_region
      _
    $region25: #{tpu_custom_call.1} parent=1 // pred_fallthru
      _
    // Predicated region
    $region26: #{tpu_custom_call.1} parent=1 // pred_check
      _
    $region27: #{tpu_custom_call.1} parent=1 // pred_check_branch
      %70 = sbr.rel (0) target = $region29
    $region28: #{tpu_custom_call.1} parent=1 // pred_region
      %72 = dma.done [#allocation3], 512
    $region29: #{tpu_custom_call.1} parent=1 // pred_fallthru
      _
    // Predicated region
    $region30: #{tpu_custom_call.1} parent=1 // pred_check
      _
    $region31: #{tpu_custom_call.1} parent=1 // pred_check_branch
      %74 = sbr.rel (0) target = $region33
    $region32: #{tpu_custom_call.1} parent=1 // pred_region
      %76 = dma.done [#allocation6], 32
    $region33: #{tpu_custom_call.1} parent=1 // pred_fallthru
      _
    // Predicated region
    $region34: #{tpu_custom_call.1} parent=1 // pred_check
      _
    $region35: #{tpu_custom_call.1} parent=1 // pred_check_branch
      %78 = sbr.rel (0) target = $region37
    $region36: #{tpu_custom_call.1} parent=1 // pred_region
      %80 = dma.done [#allocation6], 1024
    $region37: #{tpu_custom_call.1} parent=1 // pred_fallthru
      _
    // Predicated region
    $region38: #{tpu_custom_call.1} parent=1 // pred_check
      _
    $region39: #{tpu_custom_call.1} parent=1 // pred_check_branch
      %82 = sbr.rel (0) target = $region41
    $region40: #{tpu_custom_call.1} parent=1 // pred_region
      %84 = dma.done [#allocation9], 1024
    $region41: #{tpu_custom_call.1} parent=1 // pred_fallthru
      _
    %v85 = vld [vmem:[#allocation2] sm:$0xff]
    %v86 = vld [vmem:[#allocation2 + $0x8] sm:$0xff]
    %v87 = vld [vmem:[#allocation2 + $0x10] sm:$0xff]
    %v88 = vld [vmem:[#allocation2 + $0x18] sm:$0xff]
    %v89 = vpack.c.bf16 %v86, %v85
    %v90 = vpack.c.bf16 %v88, %v87
    %v91 = vld [vmem:[#allocation7] sm:$0xf]
    %v92 = vld [vmem:[#allocation7 + $0x4] sm:$0xf]
    %v93 = vld [vmem:[#allocation7 + $0x8] sm:$0xf]
    %v94 = vld [vmem:[#allocation7 + $0xc] sm:$0xf]
    %v95 = vld [vmem:[#allocation7 + $0x10] sm:$0xf]
    %v96 = vld [vmem:[#allocation7 + $0x14] sm:$0xf]
    %v97 = vld [vmem:[#allocation7 + $0x18] sm:$0xf]
    %v98 = vld [vmem:[#allocation7 + $0x1c] sm:$0xf]
    %v99 = vld [vmem:[#allocation7 + $0x20] sm:$0xf]
    %v100 = vld [vmem:[#allocation7 + $0x24] sm:$0xf]
    %v101 = vld [vmem:[#allocation7 + $0x28] sm:$0xf]
    %v102 = vld [vmem:[#allocation7 + $0x2c] sm:$0xf]
    %v103 = vld [vmem:[#allocation7 + $0x30] sm:$0xf]
    %v104 = vld [vmem:[#allocation7 + $0x34] sm:$0xf]
    %v105 = vld [vmem:[#allocation7 + $0x38] sm:$0xf]
    %v106 = vld [vmem:[#allocation7 + $0x3c] sm:$0xf]
    %v123 = vunpack.c.l.b16 %v91
    %v124 = vunpack.c.l.b16 %v92
    %v125 = vunpack.c.l.b16 %v93
    %v126 = vunpack.c.l.b16 %v94
    %v127 = vunpack.c.l.b16 %v95
    %v128 = vunpack.c.l.b16 %v96
    %v129 = vunpack.c.l.b16 %v97
    %v130 = vunpack.c.l.b16 %v98
    %v131 = vunpack.c.l.b16 %v99
    %v132 = vunpack.c.l.b16 %v100
    %v133 = vunpack.c.l.b16 %v101
    %v134 = vunpack.c.l.b16 %v102
    %v135 = vunpack.c.l.b16 %v103
    %v136 = vunpack.c.l.b16 %v104
    %v137 = vunpack.c.l.b16 %v105
    %v138 = vunpack.c.l.b16 %v106
    %v139 = vpack.c.b16 %v124, %v123
    %v140 = vpack.c.b16 %v126, %v125
    %v141 = vpack.c.b16 %v128, %v127
    %v142 = vpack.c.b16 %v130, %v129
    %v143 = vpack.c.b16 %v132, %v131
    %v144 = vpack.c.b16 %v134, %v133
    %v145 = vpack.c.b16 %v136, %v135
    %v146 = vpack.c.b16 %v138, %v137
    %155 = vmatpush.bf16.msra.mxu0 %v146
    %156 = vmatpush.bf16.msra.mxu0 %v145
    %157 = vmatpush.bf16.msra.mxu0 %v144
    %158 = vmatpush.bf16.msra.mxu0 %v143
    %159 = vmatpush.bf16.msra.mxu0 %v142
    %160 = vmatpush.bf16.msra.mxu0 %v141
    %161 = vmatpush.bf16.msra.mxu0 %v140
    %162 = vmatpush.bf16.msra.mxu0 %v139
    %163 = vmatmul.bf16.gmra.mxu0 %v89
    %v164 = vpop.f32.mrf.mxu0
    %v165 = vadd.f32 0.0, %v164
    %v166 = vpop.f32.mrf.mxu0
    %v167 = vadd.f32 0.0, %v166
    %168 = vmatmul.bf16.gmra.mxu0 %v90
    %v169 = vpop.f32.mrf.mxu0
    %v170 = vadd.f32 0.0, %v169
    %v171 = vpop.f32.mrf.mxu0
    %v172 = vadd.f32 0.0, %v171
    %173 = vdwg.mxu0
    %v174 = vld [vmem:[#allocation5] sm:$0x3]
    %v175 = vld [vmem:[#allocation8] sm:$0xf]
    %v176 = vld [vmem:[#allocation8 + $0x4] sm:$0xf]
    %v177 = vld [vmem:[#allocation8 + $0x8] sm:$0xf]
    %v178 = vld [vmem:[#allocation8 + $0xc] sm:$0xf]
    %v179 = vld [vmem:[#allocation8 + $0x10] sm:$0xf]
    %v180 = vld [vmem:[#allocation8 + $0x14] sm:$0xf]
    %v181 = vld [vmem:[#allocation8 + $0x18] sm:$0xf]
    %v182 = vld [vmem:[#allocation8 + $0x1c] sm:$0xf]
    %v183 = vld [vmem:[#allocation8 + $0x20] sm:$0xf]
    %v184 = vld [vmem:[#allocation8 + $0x24] sm:$0xf]
    %v185 = vld [vmem:[#allocation8 + $0x28] sm:$0xf]
    %v186 = vld [vmem:[#allocation8 + $0x2c] sm:$0xf]
    %v187 = vld [vmem:[#allocation8 + $0x30] sm:$0xf]
    %v188 = vld [vmem:[#allocation8 + $0x34] sm:$0xf]
    %v189 = vld [vmem:[#allocation8 + $0x38] sm:$0xf]
    %v190 = vld [vmem:[#allocation8 + $0x3c] sm:$0xf]
    %v191 = vld [vmem:[%s4] sm:$0x1]
    %v193 = vperm.slane %v191, 0
    %v211 = vunpack.c.l.b16 %v175
    %v212 = vunpack.c.l.b16 %v176
    %v213 = vunpack.c.l.b16 %v177
    %v214 = vunpack.c.l.b16 %v178
    %v215 = vunpack.c.l.b16 %v179
    %v216 = vunpack.c.l.b16 %v180
    %v217 = vunpack.c.l.b16 %v181
    %v218 = vunpack.c.l.b16 %v182
    %v219 = vunpack.c.l.b16 %v183
    %v220 = vunpack.c.l.b16 %v184
    %v221 = vunpack.c.l.b16 %v185
    %v222 = vunpack.c.l.b16 %v186
    %v223 = vunpack.c.l.b16 %v187
    %v224 = vunpack.c.l.b16 %v188
    %v225 = vunpack.c.l.b16 %v189
    %v226 = vunpack.c.l.b16 %v190
    %v227 = vpack.c.b16 %v212, %v211
    %v228 = vpack.c.b16 %v214, %v213
    %v229 = vpack.c.b16 %v216, %v215
    %v230 = vpack.c.b16 %v218, %v217
    %v231 = vpack.c.b16 %v220, %v219
    %v232 = vpack.c.b16 %v222, %v221
    %v233 = vpack.c.b16 %v224, %v223
    %v234 = vpack.c.b16 %v226, %v225
    %243 = vmatpush.bf16.msra.mxu0 %v234
    %244 = vmatpush.bf16.msra.mxu0 %v233
    %245 = vmatpush.bf16.msra.mxu0 %v232
    %246 = vmatpush.bf16.msra.mxu0 %v231
    %247 = vmatpush.bf16.msra.mxu0 %v230
    %248 = vmatpush.bf16.msra.mxu0 %v229
    %249 = vmatpush.bf16.msra.mxu0 %v228
    %250 = vmatpush.bf16.msra.mxu0 %v227
    %251 = vmatmul.bf16.gmra.mxu0 %v174
    %v252 = vpop.f32.mrf.mxu0
    %v253 = vadd.f32 %v193, %v252
    %v254 = vpop.f32.mrf.mxu0
    %255 = vdwg.mxu0
    %v257 = vrot.slane %v253, 1
    %v258 = vrot.slane %v253, 2
    %v259 = vrot.slane %v253, 3
    %v260 = vperm.slane %v253, 0
    %v261 = vperm.slane %v257, 0
    %v262 = vperm.slane %v258, 0
    %v263 = vperm.slane %v259, 0
    %v268 = vadd.f32 %v165, %v260
    %v269 = vadd.f32 %v167, %v261
    %v270 = vadd.f32 %v170, %v262
    %v271 = vadd.f32 %v172, %v263
    %v272 = vtanh.pop %v268
    %v273 = vtanh.pop %v269
    %v274 = vtanh.pop %v270
    %v275 = vtanh.pop %v271
    %v276 = vld [vmem:[%s5] sm:$0x1]
    %v278 = vperm.slane %v276, 0
    %v280 = vmul.f32 %v272, %v278
    %v281 = vmul.f32 %v273, %v278
    %v282 = vmul.f32 %v274, %v278
    %v283 = vmul.f32 %v275, %v278
    %284 = vadd.xlane.f32.xlu0 %v280
    %v285 = vpop.xlane.xlu0 %284
    %286 = vadd.xlane.f32.xlu0 %v281
    %v287 = vpop.xlane.xlu0 %286
    %288 = vadd.xlane.f32.xlu0 %v282
    %v289 = vpop.xlane.xlu0 %288
    %290 = vadd.xlane.f32.xlu0 %v283
    %v291 = vpop.xlane.xlu0 %290
    %v296 = vlaneseq
    %v297 = vand.u32 %v296, 127
    %v298 = vperm.slane %v285, %v297
    %v299 = vperm.slane %v287, %v297
    %v300 = vperm.slane %v289, %v297
    %v301 = vperm.slane %v291, %v297
    %vm302 = vcmask 1041409
    %v303 = vsel %vm302, %v299, %v298
    %vm304 = vcmask 1042434
    %v305 = vsel %vm304, %v300, %v303
    %vm306 = vcmask 1043459
    %v307 = vsel %vm306, %v301, %v305
    %vm309 = vcmask 60416
    %v310 = vsel %vm309, %v307, -inf
    %311 = vmax.xlane.f32.xlu0 %v310
    %v312 = vpop.xlane.xlu0 %311
    %v314 = vperm.slane %v312, 0
    %v315 = vperm.slane %v312, 1
    %v316 = vperm.slane %v312, 2
    %v317 = vperm.slane %v312, 3
    %v322 = vsub.f32 %v285, %v314
    %v323 = vsub.f32 %v287, %v315
    %v324 = vsub.f32 %v289, %v316
    %v325 = vsub.f32 %v291, %v317
    %v326 = vmul.f32 %v322, 1.442695
    %v327 = vpow.pop %v326
    %v328 = vmul.f32 %v323, 1.442695
    %v329 = vpow.pop %v328
    %v330 = vmul.f32 %v324, 1.442695
    %v331 = vpow.pop %v330
    %v332 = vmul.f32 %v325, 1.442695
    %v333 = vpow.pop %v332
    %338 = vset.pattern.permute.xlu0 0
    %339 = vperm.xlu0 %338, %v327
    %v340 = vpop.permute.xlu0 %339
    %341 = vset.pattern.permute.xlu0 0
    %342 = vperm.xlu0 %341, %v329
    %v343 = vpop.permute.xlu0 %342
    %344 = vset.pattern.permute.xlu0 0
    %345 = vperm.xlu0 %344, %v331
    %v346 = vpop.permute.xlu0 %345
    %347 = vset.pattern.permute.xlu0 0
    %348 = vperm.xlu0 %347, %v333
    %v349 = vpop.permute.xlu0 %348
    %v350 = vperm.slane %v340, %v297
    %v351 = vperm.slane %v343, %v297
    %v352 = vperm.slane %v346, %v297
    %v353 = vperm.slane %v349, %v297
    %v354 = vsel %vm302, %v351, %v350
    %v355 = vsel %vm304, %v352, %v354
    %v356 = vsel %vm306, %v353, %v355
    %v358 = vsel %vm309, %v356, 0.0
    %359 = vadd.xlane.f32.xlu0 %v358
    %v360 = vpop.xlane.xlu0 %359
    %v361 = vrcp.pop %v360
    %v363 = vperm.slane %v361, 0
    %v364 = vperm.slane %v361, 1
    %v365 = vperm.slane %v361, 2
    %v366 = vperm.slane %v361, 3
    %v371 = vmul.f32 %v327, %v363
    %v372 = vmul.f32 %v329, %v364
    %v373 = vmul.f32 %v331, %v365
    %v374 = vmul.f32 %v333, %v366
    %376 = vset.pattern.permute.xlu0 0
    %377 = vperm.xlu0 %376, %v371
    %v378 = vpop.permute.xlu0 %377
    %381 = vset.pattern.permute.xlu0 0
    %382 = vperm.xlu0 %381, %v372
    %v383 = vpop.permute.xlu0 %382
    %386 = vset.pattern.permute.xlu0 0
    %387 = vperm.xlu0 %386, %v373
    %v388 = vpop.permute.xlu0 %387
    %391 = vset.pattern.permute.xlu0 0
    %392 = vperm.xlu0 %391, %v374
    %v393 = vpop.permute.xlu0 %392
    %v395 = vmul.f32 %v378, %v85
    %v396 = vmul.f32 %v383, %v86
    %v397 = vmul.f32 %v388, %v87
    %v398 = vmul.f32 %v393, %v88
    %v399 = vrot.slane %v395, 4
    %v400 = vadd.f32 %v395, %v399
    %v401 = vrot.slane %v400, 2
    %v402 = vadd.f32 %v400, %v401
    %v403 = vrot.slane %v402, 1
    %v404 = vadd.f32 %v402, %v403
    %v405 = vrot.slane %v396, 4
    %v406 = vadd.f32 %v396, %v405
    %v407 = vrot.slane %v406, 2
    %v408 = vadd.f32 %v406, %v407
    %v409 = vrot.slane %v408, 1
    %v410 = vadd.f32 %v408, %v409
    %v411 = vrot.slane %v397, 4
    %v412 = vadd.f32 %v397, %v411
    %v413 = vrot.slane %v412, 2
    %v414 = vadd.f32 %v412, %v413
    %v415 = vrot.slane %v414, 1
    %v416 = vadd.f32 %v414, %v415
    %v417 = vrot.slane %v398, 4
    %v418 = vadd.f32 %v398, %v417
    %v419 = vrot.slane %v418, 2
    %v420 = vadd.f32 %v418, %v419
    %v421 = vrot.slane %v420, 1
    %v422 = vadd.f32 %v420, %v421
    %v427 = vsel %vm302, %v410, %v404
    %v428 = vsel %vm304, %v416, %v427
    %v429 = vsel %vm306, %v422, %v428
    %431 = vst [vmem:[#allocation10] sm:$0xf] %v429
    // Predicated region
    $region42: #{tpu_custom_call.1} parent=1 // pred_check
      _
    $region43: #{tpu_custom_call.1} parent=1 // pred_check_branch
      %433 = sbr.rel (0) target = $region45
    $region44: #{tpu_custom_call.1} parent=1 // pred_region
      %435 = vsyncadd [#allocation4], 0
      %s437 = sshll.u32 [#allocation10], 4
      %s438 = int_to_ptr.vmem [resolvable:$true] %s437
      %s439 = sshll.u32 %s6, 4
      %s440 = int_to_ptr.hbm [resolvable:$true] %s439
      %442 = dma.vmem_to_hbm [thread:$0]  %s438, 64, %s440, [#allocation4]
    $region45: #{tpu_custom_call.1} parent=1 // pred_fallthru
      _
    // Predicated region
    $region46: #{tpu_custom_call.1} parent=1 // pred_check
      _
    $region47: #{tpu_custom_call.1} parent=1 // pred_check_branch
      %444 = sbr.rel (0) target = $region49
    $region48: #{tpu_custom_call.1} parent=1 // pred_region
      %446 = dma.done [#allocation4], 64
    $region49: #{tpu_custom_call.1} parent=1 // pred_fallthru
      _
    %447 = vsyncpa [#allocation3], 1
    %448 = vsyncpa [#allocation6], 1
    %449 = vsyncpa [#allocation9], 1
    %450 = vsyncpa [#allocation4], 1

</llo_original>
